<compile_context>
chip_gen: v6e
topology: v6e:2x2x1
jax: 0.10.0
libtpu: 0.0.40
codegen_flags: <defaults>
</compile_context>

<pallas_src>
import jax
import jax.numpy as jnp
from jax.experimental import pallas as pl
from jax.experimental.pallas import tpu as pltpu


def _fused_double_mse(a1, b1, a2, b2, *, lanes=512, max_block_rows=512,
                      num_splits=2):
    """sum((a1-b1)^2)/a1.size + sum((a2-b2)^2)/a2.size via one pallas_call."""
    n1 = int(a1.size)
    n2 = int(a2.size)
    dt = jnp.result_type(a1.dtype, b1.dtype, a2.dtype, b2.dtype)

    # Lane-dense width (multiple of 128).  Block rows: as large as needed up to
    # max_block_rows, rounded to a multiple of 32 so the block matches the
    # packed sublane tiling of f32 (8) / bf16 (16) / int8+fp8 (32).
    needed_rows = -(-max(n1, n2) // lanes)
    block_rows = min(max_block_rows, needed_rows)
    block_rows = max(32, ((block_rows + 31) // 32) * 32)
    block_elems = block_rows * lanes

    nb1 = -(-n1 // block_elems)          # blocks owned by pair 1
    nb2 = -(-n2 // block_elems)          # blocks owned by pair 2
    total_blocks = nb1 + nb2
    blocks_per_split = -(-total_blocks // num_splits)
    padded_blocks = blocks_per_split * num_splits

    def pack(x, nblocks):
        x = x.reshape(-1).astype(dt)
        pad = nblocks * block_elems - x.size
        if pad:
            x = jnp.pad(x, (0, pad))
        return x.reshape(nblocks * block_rows, lanes)

    a_slab = jnp.concatenate([pack(a1, nb1), pack(a2, nb2)], axis=0)
    b_slab = jnp.concatenate([pack(b1, nb1), pack(b2, nb2)], axis=0)
    extra_rows = (padded_blocks - total_blocks) * block_rows
    if extra_rows:  # pad the grid to a multiple of num_splits with zero blocks
        a_slab = jnp.pad(a_slab, ((0, extra_rows), (0, 0)))
        b_slab = jnp.pad(b_slab, ((0, extra_rows), (0, 0)))

    inv1 = 1.0 / float(n1)
    inv2 = 1.0 / float(n2)

    def kernel(a_ref, b_ref, o_ref, acc_ref):
        i = pl.program_id(1)

        @pl.when(i == 0)
        def _init():
            acc_ref[...] = jnp.zeros_like(acc_ref)

        # Global block index -> which pair this block belongs to.
        gidx = pl.program_id(0) * blocks_per_split + i
        diff = a_ref[...].astype(jnp.float32) - b_ref[...].astype(jnp.float32)
        scale = jnp.where(gidx < nb1, jnp.float32(inv1), jnp.float32(inv2))
        # Pure VPU elementwise accumulate (free filler under the HBM DMA).
        acc_ref[...] += diff * diff * scale

        @pl.when(i == pl.num_programs(1) - 1)
        def _finalize():
            # Single cross-lane/sublane reduce, broadcast into a lane-dense
            # (8, 128) output block for an unmasked full-width store.
            total = jnp.sum(acc_ref[...], keepdims=True)
            o_ref[...] = jnp.broadcast_to(total, o_ref.shape)

    out = pl.pallas_call(
        kernel,
        out_shape=jax.ShapeDtypeStruct((num_splits * 8, 128), jnp.float32),
        grid_spec=pltpu.PrefetchScalarGridSpec(
            num_scalar_prefetch=0,
            grid=(num_splits, blocks_per_split),
            in_specs=[
                pl.BlockSpec((block_rows, lanes),
                             lambda c, i: (c * blocks_per_split + i, 0)),
                pl.BlockSpec((block_rows, lanes),
                             lambda c, i: (c * blocks_per_split + i, 0)),
            ],
            out_specs=pl.BlockSpec((8, 128), lambda c, i: (c, 0)),
            scratch_shapes=[pltpu.VMEM((block_rows, lanes), jnp.float32)],
        ),
        compiler_params=pltpu.CompilerParams(
            dimension_semantics=("parallel", "arbitrary"),
        ),
    )(a_slab, b_slab)

    # One partial per split (replicated across its (8, 128) block).
    return jnp.sum(out[::8, 0])


def autoencoder_adv_loss(y, target, mu=None, log_var=None, y2=None,
                         target2=None, epoch=None):
    """AutoEncoderAdv(is_vae_model=False).forward(y, target, mu, log_var, y2, target2, epoch)."""
    # AutoEncoderMSE's 2-D / same-shape contract for the reconstruction pair.
    assert len(y.shape) == 2 and y.shape == target.shape, (
        f"Bad dimension {y.shape} != {target.shape}")
    assert y2 is not None and target2 is not None and y2.shape == target2.shape, (
        "adversarial pair (y2, target2) must be provided with matching shapes")
    # mu / log_var / epoch unused when is_vae_model=False (matches PyTorch).
    return _fused_double_mse(y, target, y2, target2)


if __name__ == "__main__":
    key = jax.random.PRNGKey(0)
    k1, k2, k3, k4 = jax.random.split(key, 4)

    # Small shapes consistent with the module's contract:
    #   (y, target):  2-D reconstructions / embeddings
    #   (y2, target2): adversarial branch, any matching shape
    n, d = 16, 128
    n2, d2 = 8, 96

    y = jax.random.normal(k1, (n, d), dtype=jnp.float32)
    target = jax.random.normal(k2, (n, d), dtype=jnp.float32)
    y2 = jax.random.normal(k3, (n2, d2), dtype=jnp.float32)
    target2 = jax.random.normal(k4, (n2, d2), dtype=jnp.float32)

    loss = autoencoder_adv_loss(y, target, y2=y2, target2=target2)
    loss = jax.block_until_ready(loss)

    # Sanity check against a plain-JAX reference.
    ref = jnp.mean((y - target) ** 2) + jnp.mean((y2 - target2) ** 2)
    assert jnp.allclose(loss, ref, rtol=1e-5, atol=1e-6), (loss, ref)

    print("KERNEL_OK")
</pallas_src>

<mosaic_0001>
module attributes {stable_mosaic.version = 11 : i64} {
  func.func @kernel(%arg0: i32, %arg1: i32, %arg2: memref<32x512xf32, #tpu.memory_space<vmem>>, %arg3: memref<32x512xf32, #tpu.memory_space<vmem>>, %arg4: memref<8x128xf32, #tpu.memory_space<vmem>>, %arg5: memref<32x512xf32, #tpu.memory_space<vmem>>) attributes {dimension_semantics = [#tpu.dimension_semantics<parallel>, #tpu.dimension_semantics<arbitrary>], iteration_bounds = array<i64: 2, 1>, scalar_prefetch = 0 : i64, scratch_operands = 1 : i64, tpu.core_type = #tpu.core_type<tc>, window_params = [{transform_indices = @transform_0, window_bounds = array<i64: 32, 512>}, {transform_indices = @transform_1, window_bounds = array<i64: 32, 512>}, {transform_indices = @transform_2, window_bounds = array<i64: 8, 128>}]} {
    %c0_i32 = arith.constant 0 : i32
    %0 = arith.cmpi eq, %arg1, %c0_i32 : i32
    %1 = arith.extui %0 : i1 to i32
    %c0_i32_0 = arith.constant 0 : i32
    %2 = arith.cmpi ne, %1, %c0_i32_0 : i32
    scf.if %2 {
      %cst_12 = arith.constant 0.000000e+00 : f32
      %19 = vector.broadcast %cst_12 : f32 to vector<32x512xf32>
      %c0_13 = arith.constant 0 : index
      %c0_14 = arith.constant 0 : index
      %20 = vector.load %arg5[%c0_13, %c0_14] : memref<32x512xf32, #tpu.memory_space<vmem>>, vector<32x512xf32>
      tpu.vector_store %arg5[%c0_13, %c0_14], %19 {strides = array<i32>} : memref<32x512xf32, #tpu.memory_space<vmem>>, vector<32x512xf32>,
    } else {
    }
    %c1_i32 = arith.constant 1 : i32
    %3 = arith.muli %arg0, %c1_i32 : i32
    %4 = arith.addi %3, %arg1 : i32
    %c0 = arith.constant 0 : index
    %c0_1 = arith.constant 0 : index
    %5 = vector.load %arg2[%c0, %c0_1] : memref<32x512xf32, #tpu.memory_space<vmem>>, vector<32x512xf32>
    %c0_2 = arith.constant 0 : index
    %c0_3 = arith.constant 0 : index
    %6 = vector.load %arg3[%c0_2, %c0_3] : memref<32x512xf32, #tpu.memory_space<vmem>>, vector<32x512xf32>
    %7 = arith.subf %5, %6 : vector<32x512xf32>
    %c1_i32_4 = arith.constant 1 : i32
    %8 = arith.cmpi slt, %4, %c1_i32_4 : i32
    %cst = arith.constant 4.8828125E-4 : f32
    %cst_5 = arith.constant 0.00130208337 : f32
    %9 = arith.select %8, %cst, %cst_5 : f32
    %c0_6 = arith.constant 0 : index
    %c0_7 = arith.constant 0 : index
    %10 = vector.load %arg5[%c0_6, %c0_7] : memref<32x512xf32, #tpu.memory_space<vmem>>, vector<32x512xf32>
    %11 = arith.mulf %7, %7 : vector<32x512xf32>
    %12 = vector.broadcast %9 : f32 to vector<32x512xf32>
    %13 = arith.mulf %11, %12 : vector<32x512xf32>
    %14 = arith.addf %10, %13 : vector<32x512xf32>
    %c0_8 = arith.constant 0 : index
    %c0_9 = arith.constant 0 : index
    %15 = vector.load %arg5[%c0_8, %c0_9] : memref<32x512xf32, #tpu.memory_space<vmem>>, vector<32x512xf32>
    tpu.vector_store %arg5[%c0_8, %c0_9], %14 {strides = array<i32>} : memref<32x512xf32, #tpu.memory_space<vmem>>, vector<32x512xf32>,
    %c0_i32_10 = arith.constant 0 : i32
    %16 = arith.cmpi eq, %arg1, %c0_i32_10 : i32
    %17 = arith.extui %16 : i1 to i32
    %c0_i32_11 = arith.constant 0 : i32
    %18 = arith.cmpi ne, %17, %c0_i32_11 : i32
    scf.if %18 {
      %c0_12 = arith.constant 0 : index
      %c0_13 = arith.constant 0 : index
      %19 = vector.load %arg5[%c0_12, %c0_13] : memref<32x512xf32, #tpu.memory_space<vmem>>, vector<32x512xf32>
      %20 = vector.shape_cast %19 : vector<32x512xf32> to vector<1x32x512xf32>
      %cst_14 = arith.constant dense<0.000000e+00> : vector<1xf32>
      %21 = vector.multi_reduction <add>, %20, %cst_14 [1, 2] : vector<1x32x512xf32> to vector<1xf32>
      %22 = vector.shape_cast %21 : vector<1xf32> to vector<1x1x1xf32>
      %23 = vector.extract %22[0, 0, 0] : f32 from vector<1x1x1xf32>
      %24 = vector.broadcast %23 : f32 to vector<1x1xf32>
      %25 = vector.shape_cast %24 : vector<1x1xf32> to vector<1x1xf32>
      %26 = vector.broadcast %25 : vector<1x1xf32> to vector<8x128xf32>
      %c0_15 = arith.constant 0 : index
      %c0_16 = arith.constant 0 : index
      %27 = vector.load %arg4[%c0_15, %c0_16] : memref<8x128xf32, #tpu.memory_space<vmem>>, vector<8x128xf32>
      tpu.vector_store %arg4[%c0_15, %c0_16], %26 {strides = array<i32>} : memref<8x128xf32, #tpu.memory_space<vmem>>, vector<8x128xf32>,
    } else {
    }
    return
  }
  func.func @transform_0(%arg0: i32, %arg1: i32) -> (i32, i32) {
    %c1_i32 = arith.constant 1 : i32
    %0 = arith.muli %arg0, %c1_i32 : i32
    %1 = arith.addi %0, %arg1 : i32
    %c0_i32 = arith.constant 0 : i32
    %c0_i32_0 = arith.constant 0 : i32
    return %1, %c0_i32 : i32, i32
  }
  func.func @transform_1(%arg0: i32, %arg1: i32) -> (i32, i32) {
    %c1_i32 = arith.constant 1 : i32
    %0 = arith.muli %arg0, %c1_i32 : i32
    %1 = arith.addi %0, %arg1 : i32
    %c0_i32 = arith.constant 0 : i32
    %c0_i32_0 = arith.constant 0 : i32
    return %1, %c0_i32 : i32, i32
  }
  func.func @transform_2(%arg0: i32, %arg1: i32) -> (i32, i32) {
    %c0_i32 = arith.constant 0 : i32
    %c0_i32_0 = arith.constant 0 : i32
    return %arg0, %c0_i32 : i32, i32
  }
}

</mosaic_0001>

<llo_original>
// kernel: tpu_custom_call.1
$region0: #{tpu_custom_call.1}
  #allocation0 [shape = 'u32[]', space=smem, size = 0x4, offset = 0x4, fixed_abs, tag = 'smem constant byte address 0x4 - core index']
  #allocation1 [shape = 'u32[144,128]{1,0:T(1,128)}', space=vmem, size = 0x12000, scoped, tag = 'internal scratch']
  #allocation2 [shape = 'f32[32,512]{1,0:T(8,128)}', space=vmem, size = 0x10000, scoped, tag = 'scratch operand']
  %s0 = inlined_call_operand.hbm [shape: f32[64,512], index: 0, kind: input, shape index: {}]
  %s1 = inlined_call_operand.hbm [shape: f32[64,512], index: 1, kind: input, shape index: {}]
  %s2 = inlined_call_operand.hbm [shape: f32[16,128], index: 2, kind: output, shape index: {}]
  %s3 = sld [smem:[#allocation0]]
  $region57: #{tpu_custom_call.1} parent=0
    _
  %s5 = ssub.s32 1, %s3
  %s6 = scalar_select 0, %s5, %s3
  $region1: #{tpu_custom_call.1} parent=0
    #allocation3 [shape = 'u8[131072]{0}', space=vmem, size = 0x20000, scoped, tag = 'input window, operand 0']
    #allocation4 [shape = 's32[2]{0}', space=sflag, size = 0x8, scoped, tag = 'scoped memory for tpu_custom_call.1']
    #allocation5 [shape = 's32[2]{0}', space=sflag, size = 0x8, scoped, tag = 'scoped memory for tpu_custom_call.1']
    #allocation6 [shape = 'u8[131072]{0}', space=vmem, size = 0x20000, scoped, tag = 'input window, operand 1']
    #allocation7 [shape = 's32[2]{0}', space=sflag, size = 0x8, scoped, tag = 'scoped memory for tpu_custom_call.1']
    #allocation8 [shape = 'u8[8192]{0}', space=vmem, size = 0x2000, scoped, tag = 'output window, operand 0']
    %7 = vsyncpa [#allocation4], 0
    %s8 = scalar_lea.sflag [#allocation4], 1
    %9 = vsyncpa %s8, 0
    %10 = vsyncpa [#allocation7], 0
    %s11 = scalar_lea.sflag [#allocation7], 1
    %12 = vsyncpa %s11, 0
    %13 = vsyncpa [#allocation5], 0
    %s14 = scalar_lea.sflag [#allocation5], 1
    %15 = vsyncpa %s14, 0
    loop: start=0, step=1, limit=4
    $region2: #{tpu_custom_call.1} parent=1 // loop_pre_header
      _
    $region3: #{tpu_custom_call.1} parent=1 // loop_header
      %s17 = sphi 0, %s21
      %p18 = scmp.ge.s32.totalorder %s17, 4
      %s24 = sphi 0, %s36
      %s25 = sphi 0, %s32
      %s26 = sphi 0, %s24
      %s27 = sphi 0, %s25
      %s28 = sphi 0, %s26
      %s29 = sphi 0, %s27
      %s41 = sphi 0, %s43
      %s44 = sphi 0, %s41
      %s45 = sphi 0, %s44
      %s61 = sphi 0, %s45
      %s69 = sphi 0, %s71
      %s72 = sphi 0, %s69
      %s73 = sphi 0, %s72
      %s89 = sphi 0, %s73
      %s95 = sphi 0, %s97
      %s98 = sphi 0, %s95
      %s99 = sphi 0, %s98
      %s115 = sphi 0, %s99
    $region4: #{tpu_custom_call.1} parent=1 // loop_header_branch
      %20 = sbr.rel (%p18) target = $region8
    $region5: #{tpu_custom_call.1} parent=1 // loop_body
      %s22 = ssub.s32 %s17, 1
      %s23 = ssub.s32 %s17, 2
      %s30 = sadd.s32 1, %s25
      %p31 = scmp.ge.s32.totalorder %s30, 1
      %s32 = scalar_select %p31, 0, %s30
      %s33 = sadd.s32 1, %s24
      %s34 = scalar_select %p31, %s33, %s24
      %p35 = scmp.ge.s32.totalorder %s34, 2
      %s36 = scalar_select %p35, 0, %s34
      %s37 = sadd.s32 %s24, %s25
      %s38 = sadd.s32 %s36, %s32
      %s39 = ssub.s32 %s37, %s38
      %p40 = scmp.eq.s32.totalorder %s39, 0
      %s42 = sadd.s32 %s41, 1
      %s43 = scalar_select %p40, %s41, %s42
      %p46 = pneg %p40
      %p47 = scmp.eq.s32.totalorder %s17, 1
      %p48 = por %p46, %p47
      %p49 = scmp.ne.s32.totalorder %s41, %s44
      %p50 = scmp.eq.s32.totalorder %s17, 0
      %p51 = por %p49, %p50
      %p52 = scmp.ne.s32.totalorder %s41, %s44
      %p53 = scmp.eq.s32.totalorder %s22, 1
      %p54 = por %p52, %p53
      %p55 = scmp.ne.s32.totalorder %s44, %s45
      %p56 = scmp.eq.s32.totalorder %s22, 0
      %p57 = por %p55, %p56
      %p58 = scmp.ne.s32.totalorder %s44, %s45
      %p59 = scmp.eq.s32.totalorder %s23, 1
      %p60 = por %p58, %p59
      %p62 = scmp.ne.s32.totalorder %s45, %s61
      %p63 = scmp.eq.s32.totalorder %s23, 0
      %p64 = por %p62, %p63
      %s65 = sadd.s32 %s24, %s25
      %s66 = sadd.s32 %s36, %s32
      %s67 = ssub.s32 %s65, %s66
      %p68 = scmp.eq.s32.totalorder %s67, 0
      %s70 = sadd.s32 %s69, 1
      %s71 = scalar_select %p68, %s69, %s70
      %p74 = pneg %p68
      %p75 = scmp.eq.s32.totalorder %s17, 1
      %p76 = por %p74, %p75
      %p77 = scmp.ne.s32.totalorder %s69, %s72
      %p78 = scmp.eq.s32.totalorder %s17, 0
      %p79 = por %p77, %p78
      %p80 = scmp.ne.s32.totalorder %s69, %s72
      %p81 = scmp.eq.s32.totalorder %s22, 1
      %p82 = por %p80, %p81
      %p83 = scmp.ne.s32.totalorder %s72, %s73
      %p84 = scmp.eq.s32.totalorder %s22, 0
      %p85 = por %p83, %p84
      %p86 = scmp.ne.s32.totalorder %s72, %s73
      %p87 = scmp.eq.s32.totalorder %s23, 1
      %p88 = por %p86, %p87
      %p90 = scmp.ne.s32.totalorder %s73, %s89
      %p91 = scmp.eq.s32.totalorder %s23, 0
      %p92 = por %p90, %p91
      %s93 = ssub.s32 %s24, %s36
      %p94 = scmp.eq.s32.totalorder %s93, 0
      %s96 = sadd.s32 %s95, 1
      %s97 = scalar_select %p94, %s95, %s96
      %p100 = pneg %p94
      %p101 = scmp.eq.s32.totalorder %s17, 1
      %p102 = por %p100, %p101
      %p103 = scmp.ne.s32.totalorder %s95, %s98
      %p104 = scmp.eq.s32.totalorder %s17, 0
      %p105 = por %p103, %p104
      %p106 = scmp.ne.s32.totalorder %s95, %s98
      %p107 = scmp.eq.s32.totalorder %s22, 1
      %p108 = por %p106, %p107
      %p109 = scmp.ne.s32.totalorder %s98, %s99
      %p110 = scmp.eq.s32.totalorder %s22, 0
      %p111 = por %p109, %p110
      %p112 = scmp.ne.s32.totalorder %s98, %s99
      %p113 = scmp.eq.s32.totalorder %s23, 1
      %p114 = por %p112, %p113
      %p116 = scmp.ne.s32.totalorder %s99, %s115
      %p117 = scmp.eq.s32.totalorder %s23, 0
      %p118 = por %p116, %p117
      %p119 = scmp.le.s32.totalorder 1, %s17
      %p120 = scmp.lt.s32.totalorder %s17, 3
      %p121 = pnand %p119, %p120
      %p122 = pneg %p121
      // Predicated region
      $region9: #{tpu_custom_call.1} parent=5 // pred_check
        _
      $region10: #{tpu_custom_call.1} parent=5 // pred_check_branch
        %124 = sbr.rel (%p121) target = $region12
      $region11: #{tpu_custom_call.1} parent=5 // pred_region
        %s125 = ssub.s32 %s17, 1
      $region12: #{tpu_custom_call.1} parent=5 // pred_fallthru
        _
      %p126 = scmp.lt.s32.totalorder %s17, 2
      // Predicated region
      $region13: #{tpu_custom_call.1} parent=5 // pred_check
        %p127 = pneg %p126
      $region14: #{tpu_custom_call.1} parent=5 // pred_check_branch
        %129 = sbr.rel (%p127) target = $region16
      $region15: #{tpu_custom_call.1} parent=5 // pred_region
        // Predicated region
        $region17: #{tpu_custom_call.1} parent=15 // pred_check
          %p130 = pneg %p51
        $region18: #{tpu_custom_call.1} parent=15 // pred_check_branch
          %132 = sbr.rel (%p130) target = $region20
        $region19: #{tpu_custom_call.1} parent=15 // pred_region
          %s133 = sand.u32 %s41, 1
          %s134 = scalar_lea.sflag [#allocation4], %s133
          %s135 = sand.u32 %s41, 1
          %s136 = smul.addr %s135, 128
          %s137 = scalar_lea.vmem [#allocation3], %s136
          %s138 = sadd.s32 %s24, %s25
          %s139 = smul.u32 4, %s138
          %s141 = ssub.s32 2048, 2048
          %142 = vsyncadd %s134, %s141
          %s143 = smul.addr %s139, 4
          %s144 = smul.addr %s143, 128
          %s145 = scalar_lea.hbm %s0, %s144
          %s146 = sshll.u32 %s137, 4
          %s147 = int_to_ptr.vmem [resolvable:$true] %s146
          %152 = dma.hbm_to_vmem [thread:$0]  %s145, 2048, %s147, %s134, 512, 512, 32
        $region20: #{tpu_custom_call.1} parent=15 // pred_fallthru
          _
        // Predicated region
        $region21: #{tpu_custom_call.1} parent=15 // pred_check
          %p153 = pneg %p79
        $region22: #{tpu_custom_call.1} parent=15 // pred_check_branch
          %155 = sbr.rel (%p153) target = $region24
        $region23: #{tpu_custom_call.1} parent=15 // pred_region
          %s156 = sand.u32 %s69, 1
          %s157 = scalar_lea.sflag [#allocation7], %s156
          %s158 = sand.u32 %s69, 1
          %s159 = smul.addr %s158, 128
          %s160 = scalar_lea.vmem [#allocation6], %s159
          %s161 = sadd.s32 %s24, %s25
          %s162 = smul.u32 4, %s161
          %s164 = ssub.s32 2048, 2048
          %165 = vsyncadd %s157, %s164
          %s166 = smul.addr %s162, 4
          %s167 = smul.addr %s166, 128
          %s168 = scalar_lea.hbm %s1, %s167
          %s169 = sshll.u32 %s160, 4
          %s170 = int_to_ptr.vmem [resolvable:$true] %s169
          %175 = dma.hbm_to_vmem [thread:$0]  %s168, 2048, %s170, %s157, 512, 512, 32
        $region24: #{tpu_custom_call.1} parent=15 // pred_fallthru
          _
      $region16: #{tpu_custom_call.1} parent=5 // pred_fallthru
        _
      %p176 = scmp.le.s32.totalorder 1, %s17
      %p177 = scmp.lt.s32.totalorder %s17, 3
      %p178 = pnand %p176, %p177
      %p179 = pneg %p178
      // Predicated region
      $region25: #{tpu_custom_call.1} parent=5 // pred_check
        _
      $region26: #{tpu_custom_call.1} parent=5 // pred_check_branch
        %181 = sbr.rel (%p178) target = $region28
      $region27: #{tpu_custom_call.1} parent=5 // pred_region
        %s182 = ssub.s32 %s17, 1
        %s183 = sand.u32 %s44, 1
        %s184 = scalar_lea.sflag [#allocation4], %s183
        %s185 = sand.u32 %s44, 1
        %s186 = smul.addr %s185, 128
        %s187 = scalar_lea.vmem [#allocation3], %s186
        // Predicated region
        $region29: #{tpu_custom_call.1} parent=27 // pred_check
          %p188 = pneg %p57
        $region30: #{tpu_custom_call.1} parent=27 // pred_check_branch
          %190 = sbr.rel (%p188) target = $region32
        $region31: #{tpu_custom_call.1} parent=27 // pred_region
          %191 = dma.done %s184, 2048
        $region32: #{tpu_custom_call.1} parent=27 // pred_fallthru
          _
        %s192 = sand.u32 %s72, 1
        %s193 = scalar_lea.sflag [#allocation7], %s192
        %s194 = sand.u32 %s72, 1
        %s195 = smul.addr %s194, 128
        %s196 = scalar_lea.vmem [#allocation6], %s195
        // Predicated region
        $region33: #{tpu_custom_call.1} parent=27 // pred_check
          %p197 = pneg %p85
        $region34: #{tpu_custom_call.1} parent=27 // pred_check_branch
          %199 = sbr.rel (%p197) target = $region36
        $region35: #{tpu_custom_call.1} parent=27 // pred_region
          %200 = dma.done %s193, 2048
        $region36: #{tpu_custom_call.1} parent=27 // pred_fallthru
          _
        %s201 = sand.u32 %s44, 1
        %s202 = scalar_lea.sflag [#allocation4], %s201
        %s203 = sand.u32 %s44, 1
        %s204 = smul.addr %s203, 128
        %s205 = scalar_lea.vmem [#allocation3], %s204
        %p206 = pneg %p57
        %p207 = pneg %p54
        %s208 = sand.u32 %s72, 1
        %s209 = scalar_lea.sflag [#allocation7], %s208
        %s210 = sand.u32 %s72, 1
        %s211 = smul.addr %s210, 128
        %s212 = scalar_lea.vmem [#allocation6], %s211
        %p213 = pneg %p85
        %p214 = pneg %p82
        %p215 = pneg %p111
        %p216 = pneg %p108
        %s217 = sand.u32 %s98, 1
        %s218 = scalar_lea.sflag [#allocation5], %s217
        %s219 = sand.u32 %s98, 1
        %s220 = smul.addr %s219, 8
        %s221 = scalar_lea.vmem [#allocation8], %s220
        %s222 = sadd.s32 %s26, %s27
        %s223 = smul.u32 4, %s222
        %s224 = sadd.s32 %s26, %s27
        %s225 = smul.u32 4, %s224
        %p226 = scmp.eq.s32.totalorder %s27, 0
        // Predicated region
        $region37: #{tpu_custom_call.1} parent=27 // pred_check
          %p227 = pneg %p226
        $region38: #{tpu_custom_call.1} parent=27 // pred_check_branch
          %229 = sbr.rel (%p227) target = $region40
        $region39: #{tpu_custom_call.1} parent=27 // pred_region
          %230 = vst [vmem:[#allocation2] sm:$0xff] 0.0
          %231 = vst [vmem:[#allocation2 + $0x8] sm:$0xff] 0.0
          %232 = vst [vmem:[#allocation2 + $0x10] sm:$0xff] 0.0
          %233 = vst [vmem:[#allocation2 + $0x18] sm:$0xff] 0.0
          %234 = vst [vmem:[#allocation2 + $0x20] sm:$0xff] 0.0
          %235 = vst [vmem:[#allocation2 + $0x28] sm:$0xff] 0.0
          %236 = vst [vmem:[#allocation2 + $0x30] sm:$0xff] 0.0
          %237 = vst [vmem:[#allocation2 + $0x38] sm:$0xff] 0.0
          %238 = vst [vmem:[#allocation2 + $0x40] sm:$0xff] 0.0
          %239 = vst [vmem:[#allocation2 + $0x48] sm:$0xff] 0.0
          %240 = vst [vmem:[#allocation2 + $0x50] sm:$0xff] 0.0
          %241 = vst [vmem:[#allocation2 + $0x58] sm:$0xff] 0.0
          %242 = vst [vmem:[#allocation2 + $0x60] sm:$0xff] 0.0
          %243 = vst [vmem:[#allocation2 + $0x68] sm:$0xff] 0.0
          %244 = vst [vmem:[#allocation2 + $0x70] sm:$0xff] 0.0
          %245 = vst [vmem:[#allocation2 + $0x78] sm:$0xff] 0.0
        $region40: #{tpu_custom_call.1} parent=27 // pred_fallthru
          _
        %s246 = sadd.s32 %s26, %s27
        %v247 = vld [vmem:[%s187] sm:$0xff]
        %v248 = vld [vmem:[%s187 + $0x8] sm:$0xff]
        %v249 = vld [vmem:[%s187 + $0x10] sm:$0xff]
        %v250 = vld [vmem:[%s187 + $0x18] sm:$0xff]
        %v251 = vld [vmem:[%s187 + $0x20] sm:$0xff]
        %v252 = vld [vmem:[%s187 + $0x28] sm:$0xff]
        %v253 = vld [vmem:[%s187 + $0x30] sm:$0xff]
        %v254 = vld [vmem:[%s187 + $0x38] sm:$0xff]
        %v255 = vld [vmem:[%s187 + $0x40] sm:$0xff]
        %v256 = vld [vmem:[%s187 + $0x48] sm:$0xff]
        %v257 = vld [vmem:[%s187 + $0x50] sm:$0xff]
        %v258 = vld [vmem:[%s187 + $0x58] sm:$0xff]
        %v259 = vld [vmem:[%s187 + $0x60] sm:$0xff]
        %v260 = vld [vmem:[%s187 + $0x68] sm:$0xff]
        %v261 = vld [vmem:[%s187 + $0x70] sm:$0xff]
        %v262 = vld [vmem:[%s187 + $0x78] sm:$0xff]
        %v263 = vld [vmem:[%s196] sm:$0xff]
        %v264 = vld [vmem:[%s196 + $0x8] sm:$0xff]
        %v265 = vld [vmem:[%s196 + $0x10] sm:$0xff]
        %v266 = vld [vmem:[%s196 + $0x18] sm:$0xff]
        %v267 = vld [vmem:[%s196 + $0x20] sm:$0xff]
        %v268 = vld [vmem:[%s196 + $0x28] sm:$0xff]
        %v269 = vld [vmem:[%s196 + $0x30] sm:$0xff]
        %v270 = vld [vmem:[%s196 + $0x38] sm:$0xff]
        %v271 = vld [vmem:[%s196 + $0x40] sm:$0xff]
        %v272 = vld [vmem:[%s196 + $0x48] sm:$0xff]
        %v273 = vld [vmem:[%s196 + $0x50] sm:$0xff]
        %v274 = vld [vmem:[%s196 + $0x58] sm:$0xff]
        %v275 = vld [vmem:[%s196 + $0x60] sm:$0xff]
        %v276 = vld [vmem:[%s196 + $0x68] sm:$0xff]
        %v277 = vld [vmem:[%s196 + $0x70] sm:$0xff]
        %v278 = vld [vmem:[%s196 + $0x78] sm:$0xff]
        %v279 = vsub.f32 %v247, %v263
        %v280 = vsub.f32 %v248, %v264
        %v281 = vsub.f32 %v249, %v265
        %v282 = vsub.f32 %v250, %v266
        %v283 = vsub.f32 %v251, %v267
        %v284 = vsub.f32 %v252, %v268
        %v285 = vsub.f32 %v253, %v269
        %v286 = vsub.f32 %v254, %v270
        %v287 = vsub.f32 %v255, %v271
        %v288 = vsub.f32 %v256, %v272
        %v289 = vsub.f32 %v257, %v273
        %v290 = vsub.f32 %v258, %v274
        %v291 = vsub.f32 %v259, %v275
        %v292 = vsub.f32 %v260, %v276
        %v293 = vsub.f32 %v261, %v277
        %v294 = vsub.f32 %v262, %v278
        %p295 = scmp.lt.s32.totalorder %s246, 1
        %s296 = scalar_select %p295, 0.00048828125, 0.0013020834
        %v297 = vld [vmem:[#allocation2] sm:$0xff]
        %v298 = vld [vmem:[#allocation2 + $0x8] sm:$0xff]
        %v299 = vld [vmem:[#allocation2 + $0x10] sm:$0xff]
        %v300 = vld [vmem:[#allocation2 + $0x18] sm:$0xff]
        %v301 = vld [vmem:[#allocation2 + $0x20] sm:$0xff]
        %v302 = vld [vmem:[#allocation2 + $0x28] sm:$0xff]
        %v303 = vld [vmem:[#allocation2 + $0x30] sm:$0xff]
        %v304 = vld [vmem:[#allocation2 + $0x38] sm:$0xff]
        %v305 = vld [vmem:[#allocation2 + $0x40] sm:$0xff]
        %v306 = vld [vmem:[#allocation2 + $0x48] sm:$0xff]
        %v307 = vld [vmem:[#allocation2 + $0x50] sm:$0xff]
        %v308 = vld [vmem:[#allocation2 + $0x58] sm:$0xff]
        %v309 = vld [vmem:[#allocation2 + $0x60] sm:$0xff]
        %v310 = vld [vmem:[#allocation2 + $0x68] sm:$0xff]
        %v311 = vld [vmem:[#allocation2 + $0x70] sm:$0xff]
        %v312 = vld [vmem:[#allocation2 + $0x78] sm:$0xff]
        %v313 = vmul.f32 %v279, %v279
        %v314 = vmul.f32 %v280, %v280
        %v315 = vmul.f32 %v281, %v281
        %v316 = vmul.f32 %v282, %v282
        %v317 = vmul.f32 %v283, %v283
        %v318 = vmul.f32 %v284, %v284
        %v319 = vmul.f32 %v285, %v285
        %v320 = vmul.f32 %v286, %v286
        %v321 = vmul.f32 %v287, %v287
        %v322 = vmul.f32 %v288, %v288
        %v323 = vmul.f32 %v289, %v289
        %v324 = vmul.f32 %v290, %v290
        %v325 = vmul.f32 %v291, %v291
        %v326 = vmul.f32 %v292, %v292
        %v327 = vmul.f32 %v293, %v293
        %v328 = vmul.f32 %v294, %v294
        %v329 = vstv %s296
        %v330 = vmul.f32 %v313, %v329
        %v331 = vmul.f32 %v314, %v329
        %v332 = vmul.f32 %v315, %v329
        %v333 = vmul.f32 %v316, %v329
        %v334 = vmul.f32 %v317, %v329
        %v335 = vmul.f32 %v318, %v329
        %v336 = vmul.f32 %v319, %v329
        %v337 = vmul.f32 %v320, %v329
        %v338 = vmul.f32 %v321, %v329
        %v339 = vmul.f32 %v322, %v329
        %v340 = vmul.f32 %v323, %v329
        %v341 = vmul.f32 %v324, %v329
        %v342 = vmul.f32 %v325, %v329
        %v343 = vmul.f32 %v326, %v329
        %v344 = vmul.f32 %v327, %v329
        %v345 = vmul.f32 %v328, %v329
        %v346 = vadd.f32 %v297, %v330
        %v347 = vadd.f32 %v298, %v331
        %v348 = vadd.f32 %v299, %v332
        %v349 = vadd.f32 %v300, %v333
        %v350 = vadd.f32 %v301, %v334
        %v351 = vadd.f32 %v302, %v335
        %v352 = vadd.f32 %v303, %v336
        %v353 = vadd.f32 %v304, %v337
        %v354 = vadd.f32 %v305, %v338
        %v355 = vadd.f32 %v306, %v339
        %v356 = vadd.f32 %v307, %v340
        %v357 = vadd.f32 %v308, %v341
        %v358 = vadd.f32 %v309, %v342
        %v359 = vadd.f32 %v310, %v343
        %v360 = vadd.f32 %v311, %v344
        %v361 = vadd.f32 %v312, %v345
        %362 = vst [vmem:[#allocation2] sm:$0xff] %v346
        %363 = vst [vmem:[#allocation2 + $0x8] sm:$0xff] %v347
        %364 = vst [vmem:[#allocation2 + $0x10] sm:$0xff] %v348
        %365 = vst [vmem:[#allocation2 + $0x18] sm:$0xff] %v349
        %366 = vst [vmem:[#allocation2 + $0x20] sm:$0xff] %v350
        %367 = vst [vmem:[#allocation2 + $0x28] sm:$0xff] %v351
        %368 = vst [vmem:[#allocation2 + $0x30] sm:$0xff] %v352
        %369 = vst [vmem:[#allocation2 + $0x38] sm:$0xff] %v353
        %370 = vst [vmem:[#allocation2 + $0x40] sm:$0xff] %v354
        %371 = vst [vmem:[#allocation2 + $0x48] sm:$0xff] %v355
        %372 = vst [vmem:[#allocation2 + $0x50] sm:$0xff] %v356
        %373 = vst [vmem:[#allocation2 + $0x58] sm:$0xff] %v357
        %374 = vst [vmem:[#allocation2 + $0x60] sm:$0xff] %v358
        %375 = vst [vmem:[#allocation2 + $0x68] sm:$0xff] %v359
        %376 = vst [vmem:[#allocation2 + $0x70] sm:$0xff] %v360
        %377 = vst [vmem:[#allocation2 + $0x78] sm:$0xff] %v361
        // Predicated region
        $region41: #{tpu_custom_call.1} parent=27 // pred_check
          %p378 = pneg %p226
        $region42: #{tpu_custom_call.1} parent=27 // pred_check_branch
          %380 = sbr.rel (%p378) target = $region44
        $region43: #{tpu_custom_call.1} parent=27 // pred_region
          %v381 = vld [vmem:[#allocation2] sm:$0xff]
          %v382 = vld [vmem:[#allocation2 + $0x8] sm:$0xff]
          %v383 = vld [vmem:[#allocation2 + $0x10] sm:$0xff]
          %v384 = vld [vmem:[#allocation2 + $0x18] sm:$0xff]
          %v385 = vld [vmem:[#allocation2 + $0x20] sm:$0xff]
          %v386 = vld [vmem:[#allocation2 + $0x28] sm:$0xff]
          %v387 = vld [vmem:[#allocation2 + $0x30] sm:$0xff]
          %v388 = vld [vmem:[#allocation2 + $0x38] sm:$0xff]
          %v389 = vld [vmem:[#allocation2 + $0x40] sm:$0xff]
          %v390 = vld [vmem:[#allocation2 + $0x48] sm:$0xff]
          %v391 = vld [vmem:[#allocation2 + $0x50] sm:$0xff]
          %v392 = vld [vmem:[#allocation2 + $0x58] sm:$0xff]
          %v393 = vld [vmem:[#allocation2 + $0x60] sm:$0xff]
          %v394 = vld [vmem:[#allocation2 + $0x68] sm:$0xff]
          %v395 = vld [vmem:[#allocation2 + $0x70] sm:$0xff]
          %v396 = vld [vmem:[#allocation2 + $0x78] sm:$0xff]
          %v397 = vadd.f32 %v381, %v382
          %v398 = vadd.f32 %v397, %v383
          %v399 = vadd.f32 %v398, %v384
          %v400 = vadd.f32 %v399, %v385
          %v401 = vadd.f32 %v400, %v386
          %v402 = vadd.f32 %v401, %v387
          %v403 = vadd.f32 %v402, %v388
          %v404 = vadd.f32 %v403, %v389
          %v405 = vadd.f32 %v404, %v390
          %v406 = vadd.f32 %v405, %v391
          %v407 = vadd.f32 %v406, %v392
          %v408 = vadd.f32 %v407, %v393
          %v409 = vadd.f32 %v408, %v394
          %v410 = vadd.f32 %v409, %v395
          %v411 = vadd.f32 %v410, %v396
          %412 = vadd.xlane.f32.xlu0 %v411
          %v413 = vpop.xlane.xlu0 %412
          %v414 = vrot.slane %v413, 4
          %v415 = vadd.f32 %v413, %v414
          %v416 = vrot.slane %v415, 2
          %v417 = vadd.f32 %v415, %v416
          %v418 = vrot.slane %v417, 1
          %v419 = vadd.f32 %v417, %v418
          %s420 = vtos %v419
          %v421 = vstv %s420
          %422 = vst [vmem:[%s221] sm:$0xff] %v421
        $region44: #{tpu_custom_call.1} parent=27 // pred_fallthru
          _
        %s423 = sand.u32 %s98, 1
        %s424 = scalar_lea.sflag [#allocation5], %s423
        %s425 = sand.u32 %s98, 1
        %s426 = smul.addr %s425, 8
        %s427 = scalar_lea.vmem [#allocation8], %s426
        // Predicated region
        $region45: #{tpu_custom_call.1} parent=27 // pred_check
          %p428 = pneg %p108
        $region46: #{tpu_custom_call.1} parent=27 // pred_check_branch
          %430 = sbr.rel (%p428) target = $region48
        $region47: #{tpu_custom_call.1} parent=27 // pred_region
          %s432 = ssub.s32 128, 128
          %433 = vsyncadd %s424, %s432
          %s434 = smul.addr %s26, 128
          %s435 = scalar_lea.hbm %s2, %s434
          %s437 = sshll.u32 %s427, 4
          %s438 = int_to_ptr.vmem [resolvable:$true] %s437
          %440 = dma.vmem_to_hbm [thread:$0]  %s438, 128, %s435, %s424
        $region48: #{tpu_custom_call.1} parent=27 // pred_fallthru
          _
      $region28: #{tpu_custom_call.1} parent=5 // pred_fallthru
        _
      %p441 = scmp.le.s32.totalorder 2, %s17
      // Predicated region
      $region49: #{tpu_custom_call.1} parent=5 // pred_check
        %p442 = pneg %p441
      $region50: #{tpu_custom_call.1} parent=5 // pred_check_branch
        %444 = sbr.rel (%p442) target = $region52
      $region51: #{tpu_custom_call.1} parent=5 // pred_region
        %s445 = ssub.s32 %s17, 2
        // Predicated region
        $region53: #{tpu_custom_call.1} parent=51 // pred_check
          %p446 = pneg %p114
        $region54: #{tpu_custom_call.1} parent=51 // pred_check_branch
          %448 = sbr.rel (%p446) target = $region56
        $region55: #{tpu_custom_call.1} parent=51 // pred_region
          %s449 = sand.u32 %s99, 1
          %s450 = scalar_lea.sflag [#allocation5], %s449
          %s451 = sand.u32 %s99, 1
          %s452 = smul.addr %s451, 8
          %s453 = scalar_lea.vmem [#allocation8], %s452
          %454 = dma.done %s450, 128
        $region56: #{tpu_custom_call.1} parent=51 // pred_fallthru
          _
      $region52: #{tpu_custom_call.1} parent=5 // pred_fallthru
        _
    $region6: #{tpu_custom_call.1} parent=1 // loop_footer
      %s21 = sadd.s32 1, %s17
    $region7: #{tpu_custom_call.1} parent=1 // loop_footer_branch
      %16 = sbr.rel target = $region3
    $region8: #{tpu_custom_call.1} parent=1 // loop_exit
      _
    %455 = vsyncpa [#allocation4], 1
    %s456 = scalar_lea.sflag [#allocation4], 1
    %457 = vsyncpa %s456, 1
    %458 = vsyncpa [#allocation7], 1
    %s459 = scalar_lea.sflag [#allocation7], 1
    %460 = vsyncpa %s459, 1
    %461 = vsyncpa [#allocation5], 1
    %s462 = scalar_lea.sflag [#allocation5], 1
    %463 = vsyncpa %s462, 1

</llo_original>
